<compile_context>
chip_gen: v7x
topology: tpu7x:2x2x1
jax: 0.10.0
libtpu: 0.0.40
codegen_flags: <defaults>
</compile_context>

<pallas_src>
import math
from functools import partial

import jax
import jax.numpy as jnp
from jax.experimental import pallas as pl
from jax.experimental.pallas import tpu as pltpu


def _round_up(n: int, m: int) -> int:
    return ((n + m - 1) // m) * m


def residualnet_kernel(x_ref, w1_ref, b1_ref, w2_ref, b2_ref, w3_ref, b3_ref,
                       out_ref, *, compute_dtype=jnp.float32):
    """One batch tile, feature-major: activations are (features, TILE_B)."""
    cdt = compute_dtype

    x = x_ref[...].astype(cdt)                               # (Din, TB) lane-dense

    # fc1 / fc2 / fc3 on the MXU (it has huge slack; EUP tanh dominates),
    # always accumulating in f32.  In bf16 mode the tanh also runs in bf16
    # (faster EUP path on v6e/v7x; transparently upcast on v5e).
    z1 = jnp.dot(w1_ref[...].astype(cdt), x,
                 preferred_element_type=jnp.float32) + b1_ref[...]      # (F1, TB)
    h1 = jnp.tanh(z1.astype(cdt))                                        # (F1, TB)

    z2 = jnp.dot(w2_ref[...].astype(cdt), h1,
                 preferred_element_type=jnp.float32) + b2_ref[...]      # (F2, TB)
    h2 = jnp.tanh(z2.astype(cdt))                                        # (F2, TB)

    r = jnp.dot(w3_ref[...].astype(cdt), h2,
                preferred_element_type=jnp.float32) + b3_ref[...]       # (R, TB) f32

    # 0.5 * sum_f r[f, b]^2 : residual axis is a handful of sublane rows, so a
    # statically unrolled VPU add chain beats any XLU reduce / MXU trick and
    # lands directly in the lane-dense (1, TB) output row.
    r2 = r * r
    acc = r2[0:1, :]
    for k in range(1, r2.shape[0]):                          # R is tiny & static
        acc = acc + r2[k:k + 1, :]
    out_ref[...] = 0.5 * acc                                 # (1, TB), unmasked vst


def residualnet_forward(x, params, *, tile_b: int = 4096, use_bf16: bool = False):
    """Batched forward.  params: (w1,b1,w2,b2,w3,b3) with w_i = (out, in)
    (the native nn.Linear.weight layout) and b_i = (out, 1)."""
    w1, b1, w2, b2, w3, b3 = params

    if x.ndim == 1:                                          # PyTorch 1-D branch
        x = x[None, :]
    B, din = x.shape
    f1, f2, rdim = w1.shape[0], w2.shape[0], w3.shape[0]

    # Balance the tile against B: lane-align B, then split it into the fewest
    # ~tile_b-sized steps so the last tile is nearly full (padded rows are real
    # wasted EUP work).  Force >=2 steps when possible so v7x can shard the
    # batch axis across its two TensorCores.
    b128 = _round_up(B, 128)
    target = max(128, _round_up(min(tile_b, b128), 128))
    num_steps = -(-b128 // target)
    if b128 >= 256:
        num_steps = max(num_steps, 2)
    tile = _round_up(-(-b128 // num_steps), 128)
    b_pad = tile * num_steps

    # Feature-major, lane-dense x: (din, B) padded along the lane (batch) axis.
    xT = x.T
    if b_pad != B:
        xT = jnp.pad(xT, ((0, 0), (0, b_pad - B)))

    def resident(shape):
        # Same block index every grid step -> stays VMEM-resident, no re-DMA.
        return pl.BlockSpec(shape, lambda i: (0, 0))

    kernel = partial(
        residualnet_kernel,
        compute_dtype=jnp.bfloat16 if use_bf16 else jnp.float32,
    )

    out_row = pl.pallas_call(
        kernel,
        out_shape=jax.ShapeDtypeStruct((1, b_pad), jnp.float32),
        grid=(num_steps,),
        in_specs=[
            pl.BlockSpec((din, tile), lambda i: (0, i)),     # x tile (dense DMA)
            resident((f1, din)), resident((f1, 1)),          # fc1
            resident((f2, f1)), resident((f2, 1)),           # fc2
            resident((rdim, f2)), resident((rdim, 1)),       # fc3
        ],
        out_specs=pl.BlockSpec((1, tile), lambda i: (0, i)),
        compiler_params=pltpu.CompilerParams(
            dimension_semantics=("parallel",),               # 2-TC split on v7x
            vmem_limit_bytes=32 * 1024 * 1024,               # ~0.7 KB/row layout
        ),
    )(xT, w1, b1, w2, b2, w3, b3)

    return out_row.reshape(b_pad, 1)[:B]                     # (B, 1); (1,1) for 1-D


def init_params(key, input_dims=3, residual_dims=3, fc1_dims=64, fc2_dims=64):
    """kaiming_uniform_-style init (fan_in, gain=sqrt(2)), zero biases.
    Weights stored as (out_features, in_features) == nn.Linear.weight layout."""
    def kaiming_uniform(k, fan_out, fan_in):
        bound = math.sqrt(2.0) * math.sqrt(3.0 / fan_in)
        return jax.random.uniform(k, (fan_out, fan_in), jnp.float32, -bound, bound)

    k1, k2, k3 = jax.random.split(key, 3)
    w1 = kaiming_uniform(k1, fc1_dims, input_dims)
    w2 = kaiming_uniform(k2, fc2_dims, fc1_dims)
    w3 = kaiming_uniform(k3, residual_dims, fc2_dims)
    b1 = jnp.zeros((fc1_dims, 1), jnp.float32)
    b2 = jnp.zeros((fc2_dims, 1), jnp.float32)
    b3 = jnp.zeros((residual_dims, 1), jnp.float32)
    return (w1, b1, w2, b2, w3, b3)


def residualnet_ref(x, params):
    """Pure-JAX reference for correctness check."""
    w1, b1, w2, b2, w3, b3 = params
    if x.ndim == 1:
        x = x[None, :]
    h1 = jnp.tanh(x @ w1.T + b1.T)
    h2 = jnp.tanh(h1 @ w2.T + b2.T)
    r = h2 @ w3.T + b3.T
    return 0.5 * jnp.sum(r * r, axis=1, keepdims=True)


# TODO(synk): jacobian / hessian / gradient helpers of the PyTorch module rely on
# torch.autograd.functional; they are not part of forward() and are not ported here.

if __name__ == "__main__":
    key = jax.random.PRNGKey(0)
    kp, kx = jax.random.split(key)

    input_dims, residual_dims, fc1_dims, fc2_dims = 3, 3, 64, 64
    batch = 8

    params = init_params(kp, input_dims, residual_dims, fc1_dims, fc2_dims)
    x = jax.random.normal(kx, (batch, input_dims), jnp.float32)

    out = jax.block_until_ready(residualnet_forward(x, params))
    ref = residualnet_ref(x, params)
    assert out.shape == (batch, 1), out.shape
    assert jnp.allclose(out, ref, atol=1e-5, rtol=1e-5), (out, ref)

    # Multi-tile / padded-tail path (grid = 3 steps of 128).
    xb = jax.random.normal(kx, (300, input_dims), jnp.float32)
    outb = jax.block_until_ready(residualnet_forward(xb, params, tile_b=128))
    assert outb.shape == (300, 1), outb.shape
    assert jnp.allclose(outb, residualnet_ref(xb, params), atol=1e-5, rtol=1e-5)

    # 1-D state (PyTorch's residual.dim() == 1 branch -> (1, 1) value).
    x1 = jax.random.normal(kx, (input_dims,), jnp.float32)
    out1 = jax.block_until_ready(residualnet_forward(x1, params))
    assert out1.shape == (1, 1), out1.shape
    assert jnp.allclose(out1, residualnet_ref(x1, params), atol=1e-5, rtol=1e-5)

    # Optional bf16 fast path (EUP/MXU lever on v6e/v7x) at a looser tolerance.
    outf = jax.block_until_ready(residualnet_forward(xb, params, use_bf16=True))
    assert outf.shape == (300, 1), outf.shape
    assert jnp.allclose(outf, residualnet_ref(xb, params), atol=1e-1, rtol=1e-1)

    print("KERNEL_OK")
</pallas_src>

<mosaic_0001>
module attributes {stable_mosaic.version = 11 : i64} {
  func.func @residualnet_kernel(%arg0: i32, %arg1: memref<3x128xf32, #tpu.memory_space<vmem>>, %arg2: memref<64x3xf32, #tpu.memory_space<vmem>>, %arg3: memref<64x1xf32, #tpu.memory_space<vmem>>, %arg4: memref<64x64xf32, #tpu.memory_space<vmem>>, %arg5: memref<64x1xf32, #tpu.memory_space<vmem>>, %arg6: memref<3x64xf32, #tpu.memory_space<vmem>>, %arg7: memref<3x1xf32, #tpu.memory_space<vmem>>, %arg8: memref<1x128xf32, #tpu.memory_space<vmem>>) attributes {dimension_semantics = [#tpu.dimension_semantics<parallel>], iteration_bounds = array<i64: 1>, scalar_prefetch = 0 : i64, scratch_operands = 0 : i64, tpu.core_type = #tpu.core_type<tc>, window_params = [{transform_indices = @transform_0, window_bounds = array<i64: 3, 128>}, {pipeline_mode = #tpu.pipeline_mode<synchronous>, transform_indices = @transform_1, window_bounds = array<i64: 64, 3>}, {pipeline_mode = #tpu.pipeline_mode<synchronous>, transform_indices = @transform_2, window_bounds = array<i64: 64, 1>}, {pipeline_mode = #tpu.pipeline_mode<synchronous>, transform_indices = @transform_3, window_bounds = array<i64: 64, 64>}, {pipeline_mode = #tpu.pipeline_mode<synchronous>, transform_indices = @transform_4, window_bounds = array<i64: 64, 1>}, {pipeline_mode = #tpu.pipeline_mode<synchronous>, transform_indices = @transform_5, window_bounds = array<i64: 3, 64>}, {pipeline_mode = #tpu.pipeline_mode<synchronous>, transform_indices = @transform_6, window_bounds = array<i64: 3, 1>}, {transform_indices = @transform_7, window_bounds = array<i64: 1, 128>}]} {
    %c0 = arith.constant 0 : index
    %c0_0 = arith.constant 0 : index
    %0 = vector.load %arg1[%c0, %c0_0] : memref<3x128xf32, #tpu.memory_space<vmem>>, vector<3x128xf32>
    %c0_1 = arith.constant 0 : index
    %c0_2 = arith.constant 0 : index
    %1 = vector.load %arg2[%c0_1, %c0_2] : memref<64x3xf32, #tpu.memory_space<vmem>>, vector<64x3xf32>
    %cst = arith.constant dense<0.000000e+00> : vector<64x128xf32>
    %2 = tpu.matmul %1, %0, %cst {dimension_numbers = #tpu.dot_dimension_numbers<[1], [0], [0], [1], [0, 0, 1, 1], [], []>} : vector<64x3xf32>, vector<3x128xf32>, vector<64x128xf32> -> vector<64x128xf32>
    %c0_3 = arith.constant 0 : index
    %c0_4 = arith.constant 0 : index
    %3 = vector.load %arg3[%c0_3, %c0_4] : memref<64x1xf32, #tpu.memory_space<vmem>>, vector<64x1xf32>
    %4 = vector.broadcast %3 : vector<64x1xf32> to vector<64x128xf32>
    %5 = arith.addf %2, %4 : vector<64x128xf32>
    %6 = math.tanh %5 : vector<64x128xf32>
    %c0_5 = arith.constant 0 : index
    %c0_6 = arith.constant 0 : index
    %7 = vector.load %arg4[%c0_5, %c0_6] : memref<64x64xf32, #tpu.memory_space<vmem>>, vector<64x64xf32>
    %cst_7 = arith.constant dense<0.000000e+00> : vector<64x128xf32>
    %8 = tpu.matmul %7, %6, %cst_7 {dimension_numbers = #tpu.dot_dimension_numbers<[1], [0], [0], [1], [0, 0, 1, 1], [], []>} : vector<64x64xf32>, vector<64x128xf32>, vector<64x128xf32> -> vector<64x128xf32>
    %c0_8 = arith.constant 0 : index
    %c0_9 = arith.constant 0 : index
    %9 = vector.load %arg5[%c0_8, %c0_9] : memref<64x1xf32, #tpu.memory_space<vmem>>, vector<64x1xf32>
    %10 = vector.broadcast %9 : vector<64x1xf32> to vector<64x128xf32>
    %11 = arith.addf %8, %10 : vector<64x128xf32>
    %12 = math.tanh %11 : vector<64x128xf32>
    %c0_10 = arith.constant 0 : index
    %c0_11 = arith.constant 0 : index
    %13 = vector.load %arg6[%c0_10, %c0_11] : memref<3x64xf32, #tpu.memory_space<vmem>>, vector<3x64xf32>
    %cst_12 = arith.constant dense<0.000000e+00> : vector<3x128xf32>
    %14 = tpu.matmul %13, %12, %cst_12 {dimension_numbers = #tpu.dot_dimension_numbers<[1], [0], [0], [1], [0, 0, 1, 1], [], []>} : vector<3x64xf32>, vector<64x128xf32>, vector<3x128xf32> -> vector<3x128xf32>
    %c0_13 = arith.constant 0 : index
    %c0_14 = arith.constant 0 : index
    %15 = vector.load %arg7[%c0_13, %c0_14] : memref<3x1xf32, #tpu.memory_space<vmem>>, vector<3x1xf32>
    %16 = vector.broadcast %15 : vector<3x1xf32> to vector<3x128xf32>
    %17 = arith.addf %14, %16 : vector<3x128xf32>
    %18 = arith.mulf %17, %17 : vector<3x128xf32>
    %19 = vector.extract_strided_slice %18 {offsets = [0, 0], sizes = [1, 128], strides = [1, 1]} : vector<3x128xf32> to vector<1x128xf32>
    %20 = vector.extract_strided_slice %18 {offsets = [1, 0], sizes = [1, 128], strides = [1, 1]} : vector<3x128xf32> to vector<1x128xf32>
    %21 = arith.addf %19, %20 : vector<1x128xf32>
    %22 = vector.extract_strided_slice %18 {offsets = [2, 0], sizes = [1, 128], strides = [1, 1]} : vector<3x128xf32> to vector<1x128xf32>
    %23 = arith.addf %21, %22 : vector<1x128xf32>
    %cst_15 = arith.constant 5.000000e-01 : f32
    %24 = vector.broadcast %cst_15 : f32 to vector<1x128xf32>
    %25 = arith.mulf %24, %23 : vector<1x128xf32>
    %c0_16 = arith.constant 0 : index
    %c0_17 = arith.constant 0 : index
    %26 = vector.load %arg8[%c0_16, %c0_17] : memref<1x128xf32, #tpu.memory_space<vmem>>, vector<1x128xf32>
    tpu.vector_store %arg8[%c0_16, %c0_17], %25 {strides = array<i32>} : memref<1x128xf32, #tpu.memory_space<vmem>>, vector<1x128xf32>,
    return
  }
  func.func @transform_0(%arg0: i32) -> (i32, i32) {
    %c0_i32 = arith.constant 0 : i32
    %c0_i32_0 = arith.constant 0 : i32
    return %c0_i32, %arg0 : i32, i32
  }
  func.func @transform_1(%arg0: i32) -> (i32, i32) {
    %c0_i32 = arith.constant 0 : i32
    %c0_i32_0 = arith.constant 0 : i32
    %c0_i32_1 = arith.constant 0 : i32
    return %c0_i32, %c0_i32_0 : i32, i32
  }
  func.func @transform_2(%arg0: i32) -> (i32, i32) {
    %c0_i32 = arith.constant 0 : i32
    %c0_i32_0 = arith.constant 0 : i32
    %c0_i32_1 = arith.constant 0 : i32
    return %c0_i32, %c0_i32_0 : i32, i32
  }
  func.func @transform_3(%arg0: i32) -> (i32, i32) {
    %c0_i32 = arith.constant 0 : i32
    %c0_i32_0 = arith.constant 0 : i32
    %c0_i32_1 = arith.constant 0 : i32
    return %c0_i32, %c0_i32_0 : i32, i32
  }
  func.func @transform_4(%arg0: i32) -> (i32, i32) {
    %c0_i32 = arith.constant 0 : i32
    %c0_i32_0 = arith.constant 0 : i32
    %c0_i32_1 = arith.constant 0 : i32
    return %c0_i32, %c0_i32_0 : i32, i32
  }
  func.func @transform_5(%arg0: i32) -> (i32, i32) {
    %c0_i32 = arith.constant 0 : i32
    %c0_i32_0 = arith.constant 0 : i32
    %c0_i32_1 = arith.constant 0 : i32
    return %c0_i32, %c0_i32_0 : i32, i32
  }
  func.func @transform_6(%arg0: i32) -> (i32, i32) {
    %c0_i32 = arith.constant 0 : i32
    %c0_i32_0 = arith.constant 0 : i32
    %c0_i32_1 = arith.constant 0 : i32
    return %c0_i32, %c0_i32_0 : i32, i32
  }
  func.func @transform_7(%arg0: i32) -> (i32, i32) {
    %c0_i32 = arith.constant 0 : i32
    %c0_i32_0 = arith.constant 0 : i32
    return %c0_i32, %arg0 : i32, i32
  }
}

</mosaic_0001>

<llo_original>
// kernel: tpu_custom_call.1
$region0: #{tpu_custom_call.1}
  #allocation0 [shape = 'u32[]', space=smem, size = 0x4, offset = 0x4, fixed_abs, tag = 'smem constant byte address 0x4 - core index']
  #allocation1 [shape = 'u32[144,128]{1,0:T(1,128)}', space=vmem, size = 0x12000, scoped, tag = 'internal scratch']
  %s0 = inlined_call_operand.vmem [shape: f32[3,128], index: 0, kind: input, shape index: {}]
  %s1 = inlined_call_operand.vmem [shape: f32[64,3], index: 1, kind: input, shape index: {}]
  %s2 = inlined_call_operand.vmem [shape: f32[64,1], index: 2, kind: input, shape index: {}]
  %s3 = inlined_call_operand.vmem [shape: f32[64,64], index: 3, kind: input, shape index: {}]
  %s4 = inlined_call_operand.vmem [shape: f32[64,1], index: 4, kind: input, shape index: {}]
  %s5 = inlined_call_operand.vmem [shape: f32[3,64], index: 5, kind: input, shape index: {}]
  %s6 = inlined_call_operand.vmem [shape: f32[3,1], index: 6, kind: input, shape index: {}]
  %s7 = inlined_call_operand.hbm [shape: f32[1,128], index: 7, kind: output, shape index: {}]
  %s8 = sld [smem:[#allocation0]]
  $region38: #{tpu_custom_call.1} parent=0
    _
  %s10 = ssub.s32 1, %s8
  %s11 = scalar_select 0, %s10, %s8
  $region1: #{tpu_custom_call.1} parent=0
    #allocation2 [shape = 'u8[512]{0}', space=vmem, size = 0x400, scoped, tag = 'output window, operand 0, single buffered']
    #allocation3 [shape = 's32[1]{0}', space=sflag, size = 0x4, scoped, tag = 'scoped memory for tpu_custom_call.1']
    %12 = vsyncpa [#allocation3], 0
    // Predicated region
    $region2: #{tpu_custom_call.1} parent=1 // pred_check
      _
    $region3: #{tpu_custom_call.1} parent=1 // pred_check_branch
      %14 = sbr.rel (0) target = $region5
    $region4: #{tpu_custom_call.1} parent=1 // pred_region
      _
    $region5: #{tpu_custom_call.1} parent=1 // pred_fallthru
      _
    // Predicated region
    $region6: #{tpu_custom_call.1} parent=1 // pred_check
      _
    $region7: #{tpu_custom_call.1} parent=1 // pred_check_branch
      %16 = sbr.rel (0) target = $region9
    $region8: #{tpu_custom_call.1} parent=1 // pred_region
      _
    $region9: #{tpu_custom_call.1} parent=1 // pred_fallthru
      _
    // Predicated region
    $region10: #{tpu_custom_call.1} parent=1 // pred_check
      _
    $region11: #{tpu_custom_call.1} parent=1 // pred_check_branch
      %18 = sbr.rel (0) target = $region13
    $region12: #{tpu_custom_call.1} parent=1 // pred_region
      _
    $region13: #{tpu_custom_call.1} parent=1 // pred_fallthru
      _
    // Predicated region
    $region14: #{tpu_custom_call.1} parent=1 // pred_check
      _
    $region15: #{tpu_custom_call.1} parent=1 // pred_check_branch
      %20 = sbr.rel (0) target = $region17
    $region16: #{tpu_custom_call.1} parent=1 // pred_region
      _
    $region17: #{tpu_custom_call.1} parent=1 // pred_fallthru
      _
    // Predicated region
    $region18: #{tpu_custom_call.1} parent=1 // pred_check
      _
    $region19: #{tpu_custom_call.1} parent=1 // pred_check_branch
      %22 = sbr.rel (0) target = $region21
    $region20: #{tpu_custom_call.1} parent=1 // pred_region
      _
    $region21: #{tpu_custom_call.1} parent=1 // pred_fallthru
      _
    // Predicated region
    $region22: #{tpu_custom_call.1} parent=1 // pred_check
      _
    $region23: #{tpu_custom_call.1} parent=1 // pred_check_branch
      %24 = sbr.rel (0) target = $region25
    $region24: #{tpu_custom_call.1} parent=1 // pred_region
      _
    $region25: #{tpu_custom_call.1} parent=1 // pred_fallthru
      _
    // Predicated region
    $region26: #{tpu_custom_call.1} parent=1 // pred_check
      _
    $region27: #{tpu_custom_call.1} parent=1 // pred_check_branch
      %26 = sbr.rel (0) target = $region29
    $region28: #{tpu_custom_call.1} parent=1 // pred_region
      _
    $region29: #{tpu_custom_call.1} parent=1 // pred_fallthru
      _
    %v27 = vld [vmem:[%s0] sm:$0x7]
    %v28 = vld [vmem:[%s1] sm:$0xff]
    %v29 = vld [vmem:[%s1 + $0x8] sm:$0xff]
    %v30 = vld [vmem:[%s1 + $0x10] sm:$0xff]
    %v31 = vld [vmem:[%s1 + $0x18] sm:$0xff]
    %v32 = vld [vmem:[%s1 + $0x20] sm:$0xff]
    %v33 = vld [vmem:[%s1 + $0x28] sm:$0xff]
    %v34 = vld [vmem:[%s1 + $0x30] sm:$0xff]
    %v35 = vld [vmem:[%s1 + $0x38] sm:$0xff]
    %v36 = vld [vmem:[%s2] sm:$0xff]
    %v37 = vld [vmem:[%s2 + $0x8] sm:$0xff]
    %v38 = vld [vmem:[%s2 + $0x10] sm:$0xff]
    %v39 = vld [vmem:[%s2 + $0x18] sm:$0xff]
    %v40 = vld [vmem:[%s2 + $0x20] sm:$0xff]
    %v41 = vld [vmem:[%s2 + $0x28] sm:$0xff]
    %v42 = vld [vmem:[%s2 + $0x30] sm:$0xff]
    %v43 = vld [vmem:[%s2 + $0x38] sm:$0xff]
    %45 = vset.pattern.permute.xlu0 0
    %46 = vperm.xlu0 %45, %v36
    %v47 = vpop.permute.xlu0 %46
    %50 = vset.pattern.permute.xlu0 0
    %51 = vperm.xlu0 %50, %v37
    %v52 = vpop.permute.xlu0 %51
    %55 = vset.pattern.permute.xlu0 0
    %56 = vperm.xlu0 %55, %v38
    %v57 = vpop.permute.xlu0 %56
    %60 = vset.pattern.permute.xlu0 0
    %61 = vperm.xlu0 %60, %v39
    %v62 = vpop.permute.xlu0 %61
    %65 = vset.pattern.permute.xlu0 0
    %66 = vperm.xlu0 %65, %v40
    %v67 = vpop.permute.xlu0 %66
    %70 = vset.pattern.permute.xlu0 0
    %71 = vperm.xlu0 %70, %v41
    %v72 = vpop.permute.xlu0 %71
    %75 = vset.pattern.permute.xlu0 0
    %76 = vperm.xlu0 %75, %v42
    %v77 = vpop.permute.xlu0 %76
    %80 = vset.pattern.permute.xlu0 0
    %81 = vperm.xlu0 %80, %v43
    %v82 = vpop.permute.xlu0 %81
    %vm84 = vcmask 23552
    %v86 = vsel %vm84, %v28, 0
    %v89 = vsel %vm84, %v29, 0
    %v92 = vsel %vm84, %v30, 0
    %v95 = vsel %vm84, %v31, 0
    %v98 = vsel %vm84, %v32, 0
    %v101 = vsel %vm84, %v33, 0
    %v104 = vsel %vm84, %v34, 0
    %v107 = vsel %vm84, %v35, 0
    %vm109 = vcmask 1042432
    %v111 = vsel %vm109, %v27, 0
    %113 = vmatprep.subr.mxu0 0.0
    %114 = vmatpush1.msra.mxu0 %v111
    %115 = vmatprep.subr.mxu0 0.0
    %116 = vmatpush1.msra.mxu0 0.0
    %117 = vmatprep.subr.mxu0 0.0
    %118 = vmatpush1.msra.mxu0 0.0
    %119 = vmatprep.subr.mxu0 0.0
    %120 = vmatpush1.msra.mxu0 0.0
    %121 = vmatprep.subr.mxu0 0.0
    %122 = vmatpush1.msra.mxu0 0.0
    %123 = vmatprep.subr.mxu0 0.0
    %124 = vmatpush1.msra.mxu0 0.0
    %125 = vmatprep.subr.mxu0 0.0
    %126 = vmatpush1.msra.mxu0 0.0
    %127 = vmatprep.subr.mxu0 0.0
    %128 = vmatpush1.msra.mxu0 0.0
    %129 = vmatprep.subr.mxu0 0.0
    %130 = vmatpush1.msra.mxu0 0.0
    %131 = vmatprep.subr.mxu0 0.0
    %132 = vmatpush1.msra.mxu0 0.0
    %133 = vmatprep.subr.mxu0 0.0
    %134 = vmatpush1.msra.mxu0 0.0
    %135 = vmatprep.subr.mxu0 0.0
    %136 = vmatpush1.msra.mxu0 0.0
    %137 = vmatprep.subr.mxu0 0.0
    %138 = vmatpush1.msra.mxu0 0.0
    %139 = vmatprep.subr.mxu0 0.0
    %140 = vmatpush1.msra.mxu0 0.0
    %141 = vmatprep.subr.mxu0 0.0
    %142 = vmatpush1.msra.mxu0 0.0
    %143 = vmatprep.subr.mxu0 0.0
    %144 = vmatpush1.msra.mxu0 0.0
    %145 = vmatprep.subr.mxu0 0.0
    %146 = vmatpush1.msra.mxu0 0.0
    %147 = vmatprep.subr.mxu0 0.0
    %148 = vmatpush1.msra.mxu0 0.0
    %149 = vmatprep.subr.mxu0 0.0
    %150 = vmatpush1.msra.mxu0 0.0
    %151 = vmatprep.subr.mxu0 0.0
    %152 = vmatpush1.msra.mxu0 0.0
    %153 = vmatprep.subr.mxu0 0.0
    %154 = vmatpush1.msra.mxu0 0.0
    %155 = vmatprep.subr.mxu0 0.0
    %156 = vmatpush1.msra.mxu0 0.0
    %157 = vmatprep.subr.mxu0 0.0
    %158 = vmatpush1.msra.mxu0 0.0
    %159 = vmatprep.subr.mxu0 0.0
    %160 = vmatpush1.msra.mxu0 0.0
    %161 = vmatprep.subr.mxu0 0.0
    %162 = vmatpush1.msra.mxu0 0.0
    %163 = vmatprep.subr.mxu0 0.0
    %164 = vmatpush1.msra.mxu0 0.0
    %165 = vmatprep.subr.mxu0 0.0
    %166 = vmatpush1.msra.mxu0 0.0
    %167 = vmatprep.subr.mxu0 0.0
    %168 = vmatpush1.msra.mxu0 0.0
    %169 = vmatprep.subr.mxu0 0.0
    %170 = vmatpush1.msra.mxu0 0.0
    %171 = vmatprep.subr.mxu0 0.0
    %172 = vmatpush1.msra.mxu0 0.0
    %173 = vmatprep.subr.mxu0 0.0
    %174 = vmatpush1.msra.mxu0 0.0
    %175 = vmatprep.subr.mxu0 0.0
    %176 = vmatpush1.msra.mxu0 0.0
    %177 = vmatprep.mubr.f32.mxu0 0.0
    %178 = vmatmul.mubr.f32.gmra.mrb[0].mxu0 %v86
    %v179 = vpop.f32.mrb[0].mxu0
    %v180 = vadd.f32 %v47, %v179
    %v181 = vpop.f32.mrb[0].mxu0
    %182 = vmatprep.mubr.f32.mxu0 0.0
    %183 = vmatmul.mubr.f32.gmra.mrb[0].mxu0 %v89
    %v184 = vpop.f32.mrb[0].mxu0
    %v185 = vadd.f32 %v52, %v184
    %v186 = vpop.f32.mrb[0].mxu0
    %187 = vmatprep.mubr.f32.mxu0 0.0
    %188 = vmatmul.mubr.f32.gmra.mrb[0].mxu0 %v92
    %v189 = vpop.f32.mrb[0].mxu0
    %v190 = vadd.f32 %v57, %v189
    %v191 = vpop.f32.mrb[0].mxu0
    %192 = vmatprep.mubr.f32.mxu0 0.0
    %193 = vmatmul.mubr.f32.gmra.mrb[0].mxu0 %v95
    %v194 = vpop.f32.mrb[0].mxu0
    %v195 = vadd.f32 %v62, %v194
    %v196 = vpop.f32.mrb[0].mxu0
    %197 = vmatprep.mubr.f32.mxu0 0.0
    %198 = vmatmul.mubr.f32.gmra.mrb[0].mxu0 %v98
    %v199 = vpop.f32.mrb[0].mxu0
    %v200 = vadd.f32 %v67, %v199
    %v201 = vpop.f32.mrb[0].mxu0
    %202 = vmatprep.mubr.f32.mxu0 0.0
    %203 = vmatmul.mubr.f32.gmra.mrb[0].mxu0 %v101
    %v204 = vpop.f32.mrb[0].mxu0
    %v205 = vadd.f32 %v72, %v204
    %v206 = vpop.f32.mrb[0].mxu0
    %207 = vmatprep.mubr.f32.mxu0 0.0
    %208 = vmatmul.mubr.f32.gmra.mrb[0].mxu0 %v104
    %v209 = vpop.f32.mrb[0].mxu0
    %v210 = vadd.f32 %v77, %v209
    %v211 = vpop.f32.mrb[0].mxu0
    %212 = vmatprep.mubr.f32.mxu0 0.0
    %213 = vmatmul.mubr.f32.gmra.mrb[0].mxu0 %v107
    %v214 = vpop.f32.mrb[0].mxu0
    %v215 = vadd.f32 %v82, %v214
    %v216 = vpop.f32.mrb[0].mxu0
    %217 = vdwg.mxu0
    %v218 = vtanh.pop %v180
    %v219 = vtanh.pop %v185
    %v220 = vtanh.pop %v190
    %v221 = vtanh.pop %v195
    %v222 = vtanh.pop %v200
    %v223 = vtanh.pop %v205
    %v224 = vtanh.pop %v210
    %v225 = vtanh.pop %v215
    %v226 = vld [vmem:[%s3] sm:$0xff]
    %v227 = vld [vmem:[%s3 + $0x8] sm:$0xff]
    %v228 = vld [vmem:[%s3 + $0x10] sm:$0xff]
    %v229 = vld [vmem:[%s3 + $0x18] sm:$0xff]
    %v230 = vld [vmem:[%s3 + $0x20] sm:$0xff]
    %v231 = vld [vmem:[%s3 + $0x28] sm:$0xff]
    %v232 = vld [vmem:[%s3 + $0x30] sm:$0xff]
    %v233 = vld [vmem:[%s3 + $0x38] sm:$0xff]
    %v234 = vld [vmem:[%s4] sm:$0xff]
    %v235 = vld [vmem:[%s4 + $0x8] sm:$0xff]
    %v236 = vld [vmem:[%s4 + $0x10] sm:$0xff]
    %v237 = vld [vmem:[%s4 + $0x18] sm:$0xff]
    %v238 = vld [vmem:[%s4 + $0x20] sm:$0xff]
    %v239 = vld [vmem:[%s4 + $0x28] sm:$0xff]
    %v240 = vld [vmem:[%s4 + $0x30] sm:$0xff]
    %v241 = vld [vmem:[%s4 + $0x38] sm:$0xff]
    %243 = vset.pattern.permute.xlu0 0
    %244 = vperm.xlu0 %243, %v234
    %v245 = vpop.permute.xlu0 %244
    %248 = vset.pattern.permute.xlu0 0
    %249 = vperm.xlu0 %248, %v235
    %v250 = vpop.permute.xlu0 %249
    %253 = vset.pattern.permute.xlu0 0
    %254 = vperm.xlu0 %253, %v236
    %v255 = vpop.permute.xlu0 %254
    %258 = vset.pattern.permute.xlu0 0
    %259 = vperm.xlu0 %258, %v237
    %v260 = vpop.permute.xlu0 %259
    %263 = vset.pattern.permute.xlu0 0
    %264 = vperm.xlu0 %263, %v238
    %v265 = vpop.permute.xlu0 %264
    %268 = vset.pattern.permute.xlu0 0
    %269 = vperm.xlu0 %268, %v239
    %v270 = vpop.permute.xlu0 %269
    %273 = vset.pattern.permute.xlu0 0
    %274 = vperm.xlu0 %273, %v240
    %v275 = vpop.permute.xlu0 %274
    %278 = vset.pattern.permute.xlu0 0
    %279 = vperm.xlu0 %278, %v241
    %v280 = vpop.permute.xlu0 %279
    %vm282 = vcmask 523264
    %v284 = vsel %vm282, %v226, 0
    %v287 = vsel %vm282, %v227, 0
    %v290 = vsel %vm282, %v228, 0
    %v293 = vsel %vm282, %v229, 0
    %v296 = vsel %vm282, %v230, 0
    %v299 = vsel %vm282, %v231, 0
    %v302 = vsel %vm282, %v232, 0
    %v305 = vsel %vm282, %v233, 0
    %307 = vmatprep.subr.mxu0 0.0
    %308 = vmatpush1.msra.mxu0 %v218
    %309 = vmatprep.subr.mxu0 0.0
    %310 = vmatpush1.msra.mxu0 %v219
    %311 = vmatprep.subr.mxu0 0.0
    %312 = vmatpush1.msra.mxu0 %v220
    %313 = vmatprep.subr.mxu0 0.0
    %314 = vmatpush1.msra.mxu0 %v221
    %315 = vmatprep.subr.mxu0 0.0
    %316 = vmatpush1.msra.mxu0 %v222
    %317 = vmatprep.subr.mxu0 0.0
    %318 = vmatpush1.msra.mxu0 %v223
    %319 = vmatprep.subr.mxu0 0.0
    %320 = vmatpush1.msra.mxu0 %v224
    %321 = vmatprep.subr.mxu0 0.0
    %322 = vmatpush1.msra.mxu0 %v225
    %323 = vmatprep.subr.mxu0 0.0
    %324 = vmatpush1.msra.mxu0 0.0
    %325 = vmatprep.subr.mxu0 0.0
    %326 = vmatpush1.msra.mxu0 0.0
    %327 = vmatprep.subr.mxu0 0.0
    %328 = vmatpush1.msra.mxu0 0.0
    %329 = vmatprep.subr.mxu0 0.0
    %330 = vmatpush1.msra.mxu0 0.0
    %331 = vmatprep.subr.mxu0 0.0
    %332 = vmatpush1.msra.mxu0 0.0
    %333 = vmatprep.subr.mxu0 0.0
    %334 = vmatpush1.msra.mxu0 0.0
    %335 = vmatprep.subr.mxu0 0.0
    %336 = vmatpush1.msra.mxu0 0.0
    %337 = vmatprep.subr.mxu0 0.0
    %338 = vmatpush1.msra.mxu0 0.0
    %339 = vmatprep.subr.mxu0 0.0
    %340 = vmatpush1.msra.mxu0 0.0
    %341 = vmatprep.subr.mxu0 0.0
    %342 = vmatpush1.msra.mxu0 0.0
    %343 = vmatprep.subr.mxu0 0.0
    %344 = vmatpush1.msra.mxu0 0.0
    %345 = vmatprep.subr.mxu0 0.0
    %346 = vmatpush1.msra.mxu0 0.0
    %347 = vmatprep.subr.mxu0 0.0
    %348 = vmatpush1.msra.mxu0 0.0
    %349 = vmatprep.subr.mxu0 0.0
    %350 = vmatpush1.msra.mxu0 0.0
    %351 = vmatprep.subr.mxu0 0.0
    %352 = vmatpush1.msra.mxu0 0.0
    %353 = vmatprep.subr.mxu0 0.0
    %354 = vmatpush1.msra.mxu0 0.0
    %355 = vmatprep.subr.mxu0 0.0
    %356 = vmatpush1.msra.mxu0 0.0
    %357 = vmatprep.subr.mxu0 0.0
    %358 = vmatpush1.msra.mxu0 0.0
    %359 = vmatprep.subr.mxu0 0.0
    %360 = vmatpush1.msra.mxu0 0.0
    %361 = vmatprep.subr.mxu0 0.0
    %362 = vmatpush1.msra.mxu0 0.0
    %363 = vmatprep.subr.mxu0 0.0
    %364 = vmatpush1.msra.mxu0 0.0
    %365 = vmatprep.subr.mxu0 0.0
    %366 = vmatpush1.msra.mxu0 0.0
    %367 = vmatprep.subr.mxu0 0.0
    %368 = vmatpush1.msra.mxu0 0.0
    %369 = vmatprep.subr.mxu0 0.0
    %370 = vmatpush1.msra.mxu0 0.0
    %371 = vmatprep.mubr.f32.mxu0 0.0
    %372 = vmatmul.mubr.f32.gmra.mrb[0].mxu0 %v284
    %v373 = vpop.f32.mrb[0].mxu0
    %v374 = vadd.f32 %v245, %v373
    %v375 = vpop.f32.mrb[0].mxu0
    %376 = vmatprep.mubr.f32.mxu0 0.0
    %377 = vmatmul.mubr.f32.gmra.mrb[0].mxu0 %v287
    %v378 = vpop.f32.mrb[0].mxu0
    %v379 = vadd.f32 %v250, %v378
    %v380 = vpop.f32.mrb[0].mxu0
    %381 = vmatprep.mubr.f32.mxu0 0.0
    %382 = vmatmul.mubr.f32.gmra.mrb[0].mxu0 %v290
    %v383 = vpop.f32.mrb[0].mxu0
    %v384 = vadd.f32 %v255, %v383
    %v385 = vpop.f32.mrb[0].mxu0
    %386 = vmatprep.mubr.f32.mxu0 0.0
    %387 = vmatmul.mubr.f32.gmra.mrb[0].mxu0 %v293
    %v388 = vpop.f32.mrb[0].mxu0
    %v389 = vadd.f32 %v260, %v388
    %v390 = vpop.f32.mrb[0].mxu0
    %391 = vmatprep.mubr.f32.mxu0 0.0
    %392 = vmatmul.mubr.f32.gmra.mrb[0].mxu0 %v296
    %v393 = vpop.f32.mrb[0].mxu0
    %v394 = vadd.f32 %v265, %v393
    %v395 = vpop.f32.mrb[0].mxu0
    %396 = vmatprep.mubr.f32.mxu0 0.0
    %397 = vmatmul.mubr.f32.gmra.mrb[0].mxu0 %v299
    %v398 = vpop.f32.mrb[0].mxu0
    %v399 = vadd.f32 %v270, %v398
    %v400 = vpop.f32.mrb[0].mxu0
    %401 = vmatprep.mubr.f32.mxu0 0.0
    %402 = vmatmul.mubr.f32.gmra.mrb[0].mxu0 %v302
    %v403 = vpop.f32.mrb[0].mxu0
    %v404 = vadd.f32 %v275, %v403
    %v405 = vpop.f32.mrb[0].mxu0
    %406 = vmatprep.mubr.f32.mxu0 0.0
    %407 = vmatmul.mubr.f32.gmra.mrb[0].mxu0 %v305
    %v408 = vpop.f32.mrb[0].mxu0
    %v409 = vadd.f32 %v280, %v408
    %v410 = vpop.f32.mrb[0].mxu0
    %411 = vdwg.mxu0
    %v412 = vtanh.pop %v374
    %v413 = vtanh.pop %v379
    %v414 = vtanh.pop %v384
    %v415 = vtanh.pop %v389
    %v416 = vtanh.pop %v394
    %v417 = vtanh.pop %v399
    %v418 = vtanh.pop %v404
    %v419 = vtanh.pop %v409
    %v420 = vld [vmem:[%s5] sm:$0x7]
    %v421 = vld [vmem:[%s6] sm:$0x7]
    %423 = vset.pattern.permute.xlu0 0
    %424 = vperm.xlu0 %423, %v421
    %v425 = vpop.permute.xlu0 %424
    %v428 = vsel %vm282, %v420, 0
    %430 = vmatprep.subr.mxu0 0.0
    %431 = vmatpush1.msra.mxu0 %v412
    %432 = vmatprep.subr.mxu0 0.0
    %433 = vmatpush1.msra.mxu0 %v413
    %434 = vmatprep.subr.mxu0 0.0
    %435 = vmatpush1.msra.mxu0 %v414
    %436 = vmatprep.subr.mxu0 0.0
    %437 = vmatpush1.msra.mxu0 %v415
    %438 = vmatprep.subr.mxu0 0.0
    %439 = vmatpush1.msra.mxu0 %v416
    %440 = vmatprep.subr.mxu0 0.0
    %441 = vmatpush1.msra.mxu0 %v417
    %442 = vmatprep.subr.mxu0 0.0
    %443 = vmatpush1.msra.mxu0 %v418
    %444 = vmatprep.subr.mxu0 0.0
    %445 = vmatpush1.msra.mxu0 %v419
    %446 = vmatprep.subr.mxu0 0.0
    %447 = vmatpush1.msra.mxu0 0.0
    %448 = vmatprep.subr.mxu0 0.0
    %449 = vmatpush1.msra.mxu0 0.0
    %450 = vmatprep.subr.mxu0 0.0
    %451 = vmatpush1.msra.mxu0 0.0
    %452 = vmatprep.subr.mxu0 0.0
    %453 = vmatpush1.msra.mxu0 0.0
    %454 = vmatprep.subr.mxu0 0.0
    %455 = vmatpush1.msra.mxu0 0.0
    %456 = vmatprep.subr.mxu0 0.0
    %457 = vmatpush1.msra.mxu0 0.0
    %458 = vmatprep.subr.mxu0 0.0
    %459 = vmatpush1.msra.mxu0 0.0
    %460 = vmatprep.subr.mxu0 0.0
    %461 = vmatpush1.msra.mxu0 0.0
    %462 = vmatprep.subr.mxu0 0.0
    %463 = vmatpush1.msra.mxu0 0.0
    %464 = vmatprep.subr.mxu0 0.0
    %465 = vmatpush1.msra.mxu0 0.0
    %466 = vmatprep.subr.mxu0 0.0
    %467 = vmatpush1.msra.mxu0 0.0
    %468 = vmatprep.subr.mxu0 0.0
    %469 = vmatpush1.msra.mxu0 0.0
    %470 = vmatprep.subr.mxu0 0.0
    %471 = vmatpush1.msra.mxu0 0.0
    %472 = vmatprep.subr.mxu0 0.0
    %473 = vmatpush1.msra.mxu0 0.0
    %474 = vmatprep.subr.mxu0 0.0
    %475 = vmatpush1.msra.mxu0 0.0
    %476 = vmatprep.subr.mxu0 0.0
    %477 = vmatpush1.msra.mxu0 0.0
    %478 = vmatprep.subr.mxu0 0.0
    %479 = vmatpush1.msra.mxu0 0.0
    %480 = vmatprep.subr.mxu0 0.0
    %481 = vmatpush1.msra.mxu0 0.0
    %482 = vmatprep.subr.mxu0 0.0
    %483 = vmatpush1.msra.mxu0 0.0
    %484 = vmatprep.subr.mxu0 0.0
    %485 = vmatpush1.msra.mxu0 0.0
    %486 = vmatprep.subr.mxu0 0.0
    %487 = vmatpush1.msra.mxu0 0.0
    %488 = vmatprep.subr.mxu0 0.0
    %489 = vmatpush1.msra.mxu0 0.0
    %490 = vmatprep.subr.mxu0 0.0
    %491 = vmatpush1.msra.mxu0 0.0
    %492 = vmatprep.subr.mxu0 0.0
    %493 = vmatpush1.msra.mxu0 0.0
    %494 = vmatprep.mubr.f32.mxu0 0.0
    %495 = vmatmul.mubr.f32.gmra.mrb[0].mxu0 %v428
    %v496 = vpop.f32.mrb[0].mxu0
    %v497 = vadd.f32 %v425, %v496
    %v498 = vpop.f32.mrb[0].mxu0
    %499 = vdwg.mxu0
    %v500 = vmul.f32 %v497, %v497
    %v502 = vrot.slane %v500, 1
    %v504 = vadd.f32 %v500, %v502
    %v505 = vrot.slane %v500, 2
    %v507 = vadd.f32 %v504, %v505
    %v508 = vmul.f32 %v507, 0.5
    %509 = vst [vmem:[#allocation2] sm:$0x1] %v508
    // Predicated region
    $region30: #{tpu_custom_call.1} parent=1 // pred_check
      _
    $region31: #{tpu_custom_call.1} parent=1 // pred_check_branch
      %511 = sbr.rel (0) target = $region33
    $region32: #{tpu_custom_call.1} parent=1 // pred_region
      %s513 = ssub.s32 16, 16
      %514 = vsyncadd [#allocation3], %s513
      %s516 = sshll.u32 [#allocation2], 4
      %s517 = int_to_ptr.vmem [resolvable:$true] %s516
      %519 = dma.vmem_to_hbm [thread:$0]  %s517, 16, %s7, [#allocation3]
    $region33: #{tpu_custom_call.1} parent=1 // pred_fallthru
      _
    // Predicated region
    $region34: #{tpu_custom_call.1} parent=1 // pred_check
      _
    $region35: #{tpu_custom_call.1} parent=1 // pred_check_branch
      %521 = sbr.rel (0) target = $region37
    $region36: #{tpu_custom_call.1} parent=1 // pred_region
      %522 = dma.done [#allocation3], 16
    $region37: #{tpu_custom_call.1} parent=1 // pred_fallthru
      _
    %523 = vsyncpa [#allocation3], 1

</llo_original>
